<compile_context>
chip_gen: v5e
topology: v5e:2x2
jax: 0.10.0
libtpu: 0.0.40
codegen_flags: <defaults>
</compile_context>

<pallas_src>
import functools

import jax
import jax.numpy as jnp
from jax.experimental import pallas as pl
from jax.experimental.pallas import tpu as pltpu


def _round_up(n, m):
    return -(-n // m) * m


def _row_mask(x, n_rows, tile_n):
    # Zero rows past the real row count (only the ragged last block has any).
    rows = (jax.lax.broadcasted_iota(jnp.int32, (x.shape[0], 1), 0)
            + pl.program_id(0) * tile_n)
    return jnp.where(rows < n_rows, x, jnp.zeros_like(x))


def _gn_kernel_g1(x_ref, w_ref, b_ref, o_ref, *,
                  inv_c, eps, n_rows, tile_n, mask_tail, op_dtype):
    """num_groups == 1 (LayerNorm-like): lane-reduction stats, no MXU work."""
    x = x_ref[...].astype(op_dtype)                     # (tn, C)
    if mask_tail:
        x = _row_mask(x, n_rows, tile_n)
    xf = x.astype(jnp.float32)
    s = jnp.sum(xf, axis=-1, keepdims=True)             # (tn, 1)
    sq = jnp.sum(xf * xf, axis=-1, keepdims=True)       # (tn, 1)
    mean = s * inv_c
    var = jnp.maximum(sq * inv_c - mean * mean, 0.0)    # biased variance
    inv = jax.lax.rsqrt(var + eps)                      # (tn, 1) f32

    w = w_ref[...]                                      # (1, C) f32
    b = b_ref[...]                                      # (1, C) f32
    scale = inv * w                                     # (tn, C) f32
    shift = b - (mean * inv) * w                        # (tn, C) f32

    if jnp.dtype(op_dtype) == jnp.dtype(jnp.bfloat16):
        y = x * scale.astype(op_dtype) + shift.astype(op_dtype)
    else:
        y = xf * scale + shift
    o_ref[...] = y.astype(o_ref.dtype)


def _gn_kernel(x_ref, mask_ref, maskt_w_ref, b_ref, o_ref, *,
               inv_group_size, eps, n_rows, tile_n, mask_tail, op_dtype):
    """num_groups > 1: group stats + group->channel broadcast on the MXU."""
    x = x_ref[...].astype(op_dtype)                     # (tn, C), native dtype
    if mask_tail:
        x = _row_mask(x, n_rows, tile_n)
    mask = mask_ref[...]                                # (C, G) one-hot, op_dtype
    maskt_w = maskt_w_ref[...]                          # (G, C) = mask.T * weight
    b = b_ref[...]                                      # (1, C) f32

    # Per-group sums / sums of squares; native-dtype operands, f32 accumulation.
    sums = jnp.dot(x, mask, preferred_element_type=jnp.float32)        # (tn, G)
    sqs = jnp.dot(x * x, mask, preferred_element_type=jnp.float32)     # (tn, G)

    mean = sums * inv_group_size                                       # (tn, G)
    var = jnp.maximum(sqs * inv_group_size - mean * mean, 0.0)         # biased
    inv = jax.lax.rsqrt(var + eps)                                     # (tn, G) f32

    # Broadcast group stats to channels with weight folded in.
    scale_c = jnp.dot(inv.astype(op_dtype), maskt_w,
                      preferred_element_type=jnp.float32)              # (tn, C)
    shift_c = b - jnp.dot((mean * inv).astype(op_dtype), maskt_w,
                          preferred_element_type=jnp.float32)          # (tn, C)

    if jnp.dtype(op_dtype) == jnp.dtype(jnp.bfloat16):
        y = x * scale_c.astype(op_dtype) + shift_c.astype(op_dtype)
    else:
        y = x * scale_c + shift_c
    o_ref[...] = y.astype(o_ref.dtype)


def group_norm(x, weight, bias, num_groups, eps=1e-5, tile_n=1024,
               vmem_limit_bytes=None):
    """x: (B, T, C); weight, bias: (C,). Returns (B, T, C)."""
    B, T, C = x.shape
    G = int(num_groups)
    assert C % G == 0, "embed_dim must be divisible by num_groups"
    N = B * T
    group_size = C // G
    itemsize = jnp.dtype(x.dtype).itemsize

    # MXU / elementwise operand dtype: keep bf16 I/O in bf16, everything else f32.
    op_dtype = jnp.bfloat16 if jnp.dtype(x.dtype) == jnp.dtype(jnp.bfloat16) \
        else jnp.float32

    # Row tile: sublane-aligned for the dtype (8 f32 / 16 bf16 / 32 int8),
    # shrunk for small inputs; keep >= 2 grid steps so dual-TC parts get work.
    row_align = 8 if itemsize >= 4 else (16 if itemsize == 2 else 32)
    tile_n = max(row_align, min(int(tile_n), _round_up(N, row_align)))
    tile_n = _round_up(tile_n, row_align)
    if N > row_align and pl.cdiv(N, tile_n) < 2:
        tile_n = max(row_align, _round_up(pl.cdiv(N, 2), row_align))
    grid = pl.cdiv(N, tile_n)
    mask_tail = (N % tile_n) != 0

    x2d = x.reshape(N, C)
    b2d = bias.astype(jnp.float32).reshape(1, C)

    if vmem_limit_bytes is None:
        try:
            info = pltpu.get_tpu_info()
            vmem_cap = int(getattr(info, "vmem_capacity_bytes", 64 * 2**20))
        except Exception:
            vmem_cap = 64 * 2**20  # conservative: v7x per-TensorCore VMEM
        need = (2 * 2 * tile_n * C * itemsize      # double-buffered in/out tiles
                + 4 * tile_n * C * 4               # intermediate headroom
                + (2 * C * G + 2 * C) * 4)         # mask / maskT*w / bias residents
        vmem_limit_bytes = int(min(vmem_cap * 3 // 4,
                                   max(32 * 2**20, int(need * 1.25))))

    x_spec = pl.BlockSpec((tile_n, C), lambda i: (i, 0))
    vec_spec = pl.BlockSpec((1, C), lambda i: (0, 0))
    out_spec = pl.BlockSpec((tile_n, C), lambda i: (i, 0))

    if G == 1:
        w2d = weight.astype(jnp.float32).reshape(1, C)
        kernel = functools.partial(
            _gn_kernel_g1, inv_c=float(1.0 / C), eps=float(eps),
            n_rows=N, tile_n=tile_n, mask_tail=mask_tail, op_dtype=op_dtype)
        in_specs = [x_spec, vec_spec, vec_spec]
        args = (x2d, w2d, b2d)
        flops = 10 * N * C
    else:
        ch = jnp.arange(C)
        onehot = (ch[:, None] // group_size
                  == jnp.arange(G)[None, :]).astype(op_dtype)          # (C, G)
        maskt_w = (onehot.T.astype(jnp.float32)
                   * weight.astype(jnp.float32)[None, :]).astype(op_dtype)  # (G, C)
        kernel = functools.partial(
            _gn_kernel, inv_group_size=float(1.0 / group_size), eps=float(eps),
            n_rows=N, tile_n=tile_n, mask_tail=mask_tail, op_dtype=op_dtype)
        in_specs = [x_spec,
                    pl.BlockSpec((C, G), lambda i: (0, 0)),
                    pl.BlockSpec((G, C), lambda i: (0, 0)),
                    vec_spec]
        args = (x2d, onehot, maskt_w, b2d)
        flops = 8 * N * C * G + 6 * N * C

    cost = pl.CostEstimate(
        flops=int(flops),
        transcendentals=int(N * G),
        bytes_accessed=int(2 * N * C * itemsize + (2 * C * G + 2 * C) * 4),
    )

    out2d = pl.pallas_call(
        kernel,
        out_shape=jax.ShapeDtypeStruct((N, C), x.dtype),
        grid_spec=pltpu.PrefetchScalarGridSpec(
            num_scalar_prefetch=0,
            grid=(grid,),
            in_specs=in_specs,
            out_specs=out_spec,
        ),
        compiler_params=pltpu.CompilerParams(
            dimension_semantics=("parallel",),
            vmem_limit_bytes=vmem_limit_bytes,
        ),
        cost_estimate=cost,
    )(*args)

    return out2d.reshape(B, T, C)


def _reference_group_norm(x, weight, bias, num_groups, eps=1e-5):
    B, T, C = x.shape
    G = num_groups
    xg = x.reshape(B * T, G, C // G).astype(jnp.float32)
    mean = xg.mean(axis=-1, keepdims=True)
    var = ((xg - mean) ** 2).mean(axis=-1, keepdims=True)
    y = (xg - mean) / jnp.sqrt(var + eps)
    y = y.reshape(B * T, C) * weight[None, :] + bias[None, :]
    return y.reshape(B, T, C).astype(x.dtype)


if __name__ == "__main__":
    key = jax.random.PRNGKey(0)
    kx, kw, kb, kx2 = jax.random.split(key, 4)

    B, T, C = 2, 8, 32
    G = 4
    x = jax.random.normal(kx, (B, T, C), dtype=jnp.float32)
    weight = 1.0 + 0.1 * jax.random.normal(kw, (C,), dtype=jnp.float32)
    bias = 0.1 * jax.random.normal(kb, (C,), dtype=jnp.float32)

    # Case 1: f32, grouped (MXU stats path), evenly divided row grid.
    out = jax.block_until_ready(group_norm(x, weight, bias, G))
    ref = _reference_group_norm(x, weight, bias, G)
    assert out.shape == (B, T, C)
    assert jnp.allclose(out, ref, atol=2e-5, rtol=2e-5), "mismatch vs reference (case 1)"

    # Case 2: row count not a multiple of the tile -> ragged last block
    # (in-kernel tail mask + dropped OOB stores, no host pad/slice).
    B2, T2 = 3, 5
    x2 = jax.random.normal(kx2, (B2, T2, C), dtype=jnp.float32)
    out2 = jax.block_until_ready(group_norm(x2, weight, bias, G))
    ref2 = _reference_group_norm(x2, weight, bias, G)
    assert out2.shape == (B2, T2, C)
    assert jnp.allclose(out2, ref2, atol=2e-5, rtol=2e-5), "mismatch vs reference (case 2)"

    # Case 3: num_groups == 1 (LayerNorm-like specialization, zero MXU work).
    out3 = jax.block_until_ready(group_norm(x, weight, bias, 1))
    ref3 = _reference_group_norm(x, weight, bias, 1)
    assert jnp.allclose(out3, ref3, atol=2e-5, rtol=2e-5), "mismatch vs reference (case 3)"

    # Case 4: bf16 I/O -> bf16 MXU operands with f32 accumulation, bf16 affine.
    xb = x.astype(jnp.bfloat16)
    out4 = jax.block_until_ready(group_norm(xb, weight, bias, G))
    ref4 = _reference_group_norm(xb, weight, bias, G)
    assert out4.dtype == jnp.bfloat16
    assert jnp.allclose(out4.astype(jnp.float32), ref4.astype(jnp.float32),
                        atol=6e-2, rtol=6e-2), "mismatch vs reference (case 4)"

    print("KERNEL_OK")
</pallas_src>

<mosaic_0001>
module attributes {stable_mosaic.version = 11 : i64} {
  func.func @_gn_kernel(%arg0: i32, %arg1: memref<8x32xf32, #tpu.memory_space<vmem>>, %arg2: memref<32x4xf32, #tpu.memory_space<vmem>>, %arg3: memref<4x32xf32, #tpu.memory_space<vmem>>, %arg4: memref<1x32xf32, #tpu.memory_space<vmem>>, %arg5: memref<8x32xf32, #tpu.memory_space<vmem>>) attributes {dimension_semantics = [#tpu.dimension_semantics<parallel>], iteration_bounds = array<i64: 2>, scalar_prefetch = 0 : i64, scratch_operands = 0 : i64, tpu.core_type = #tpu.core_type<tc>, window_params = [{transform_indices = @transform_0, window_bounds = array<i64: 8, 32>}, {pipeline_mode = #tpu.pipeline_mode<synchronous>, transform_indices = @transform_1, window_bounds = array<i64: 32, 4>}, {pipeline_mode = #tpu.pipeline_mode<synchronous>, transform_indices = @transform_2, window_bounds = array<i64: 4, 32>}, {pipeline_mode = #tpu.pipeline_mode<synchronous>, transform_indices = @transform_3, window_bounds = array<i64: 1, 32>}, {transform_indices = @transform_4, window_bounds = array<i64: 8, 32>}]} {
    %c0 = arith.constant 0 : index
    %c0_0 = arith.constant 0 : index
    %0 = vector.load %arg1[%c0, %c0_0] : memref<8x32xf32, #tpu.memory_space<vmem>>, vector<8x32xf32>
    %c0_1 = arith.constant 0 : index
    %c0_2 = arith.constant 0 : index
    %1 = vector.load %arg2[%c0_1, %c0_2] : memref<32x4xf32, #tpu.memory_space<vmem>>, vector<32x4xf32>
    %c0_3 = arith.constant 0 : index
    %c0_4 = arith.constant 0 : index
    %2 = vector.load %arg3[%c0_3, %c0_4] : memref<4x32xf32, #tpu.memory_space<vmem>>, vector<4x32xf32>
    %c0_5 = arith.constant 0 : index
    %c0_6 = arith.constant 0 : index
    %3 = vector.load %arg4[%c0_5, %c0_6] : memref<1x32xf32, #tpu.memory_space<vmem>>, vector<1x32xf32>
    %cst = arith.constant dense<0.000000e+00> : vector<8x4xf32>
    %4 = tpu.matmul %0, %1, %cst {dimension_numbers = #tpu.dot_dimension_numbers<[1], [0], [0], [1], [0, 0, 1, 1], [], []>} : vector<8x32xf32>, vector<32x4xf32>, vector<8x4xf32> -> vector<8x4xf32>
    %5 = arith.mulf %0, %0 : vector<8x32xf32>
    %cst_7 = arith.constant dense<0.000000e+00> : vector<8x4xf32>
    %6 = tpu.matmul %5, %1, %cst_7 {dimension_numbers = #tpu.dot_dimension_numbers<[1], [0], [0], [1], [0, 0, 1, 1], [], []>} : vector<8x32xf32>, vector<32x4xf32>, vector<8x4xf32> -> vector<8x4xf32>
    %cst_8 = arith.constant 1.250000e-01 : f32
    %7 = vector.broadcast %cst_8 : f32 to vector<8x4xf32>
    %8 = arith.mulf %4, %7 : vector<8x4xf32>
    %cst_9 = arith.constant 1.250000e-01 : f32
    %9 = vector.broadcast %cst_9 : f32 to vector<8x4xf32>
    %10 = arith.mulf %6, %9 : vector<8x4xf32>
    %11 = arith.mulf %8, %8 : vector<8x4xf32>
    %12 = arith.subf %10, %11 : vector<8x4xf32>
    %cst_10 = arith.constant 0.000000e+00 : f32
    %13 = vector.broadcast %cst_10 : f32 to vector<8x4xf32>
    %14 = arith.maximumf %12, %13 : vector<8x4xf32>
    %cst_11 = arith.constant 9.99999974E-6 : f32
    %15 = vector.broadcast %cst_11 : f32 to vector<8x4xf32>
    %16 = arith.addf %14, %15 : vector<8x4xf32>
    %17 = math.rsqrt %16 : vector<8x4xf32>
    %cst_12 = arith.constant dense<0.000000e+00> : vector<8x32xf32>
    %18 = tpu.matmul %17, %2, %cst_12 {dimension_numbers = #tpu.dot_dimension_numbers<[1], [0], [0], [1], [0, 0, 1, 1], [], []>} : vector<8x4xf32>, vector<4x32xf32>, vector<8x32xf32> -> vector<8x32xf32>
    %19 = arith.mulf %8, %17 : vector<8x4xf32>
    %cst_13 = arith.constant dense<0.000000e+00> : vector<8x32xf32>
    %20 = tpu.matmul %19, %2, %cst_13 {dimension_numbers = #tpu.dot_dimension_numbers<[1], [0], [0], [1], [0, 0, 1, 1], [], []>} : vector<8x4xf32>, vector<4x32xf32>, vector<8x32xf32> -> vector<8x32xf32>
    %21 = vector.broadcast %3 : vector<1x32xf32> to vector<8x32xf32>
    %22 = arith.subf %21, %20 : vector<8x32xf32>
    %23 = arith.mulf %0, %18 : vector<8x32xf32>
    %24 = arith.addf %23, %22 : vector<8x32xf32>
    %c0_14 = arith.constant 0 : index
    %c0_15 = arith.constant 0 : index
    %25 = vector.load %arg5[%c0_14, %c0_15] : memref<8x32xf32, #tpu.memory_space<vmem>>, vector<8x32xf32>
    tpu.vector_store %arg5[%c0_14, %c0_15], %24 {strides = array<i32>} : memref<8x32xf32, #tpu.memory_space<vmem>>, vector<8x32xf32>,
    return
  }
  func.func @transform_0(%arg0: i32) -> (i32, i32) {
    %c0_i32 = arith.constant 0 : i32
    %c0_i32_0 = arith.constant 0 : i32
    return %arg0, %c0_i32 : i32, i32
  }
  func.func @transform_1(%arg0: i32) -> (i32, i32) {
    %c0_i32 = arith.constant 0 : i32
    %c0_i32_0 = arith.constant 0 : i32
    %c0_i32_1 = arith.constant 0 : i32
    return %c0_i32, %c0_i32_0 : i32, i32
  }
  func.func @transform_2(%arg0: i32) -> (i32, i32) {
    %c0_i32 = arith.constant 0 : i32
    %c0_i32_0 = arith.constant 0 : i32
    %c0_i32_1 = arith.constant 0 : i32
    return %c0_i32, %c0_i32_0 : i32, i32
  }
  func.func @transform_3(%arg0: i32) -> (i32, i32) {
    %c0_i32 = arith.constant 0 : i32
    %c0_i32_0 = arith.constant 0 : i32
    %c0_i32_1 = arith.constant 0 : i32
    return %c0_i32, %c0_i32_0 : i32, i32
  }
  func.func @transform_4(%arg0: i32) -> (i32, i32) {
    %c0_i32 = arith.constant 0 : i32
    %c0_i32_0 = arith.constant 0 : i32
    return %arg0, %c0_i32 : i32, i32
  }
}

</mosaic_0001>

<llo_original>
// kernel: tpu_custom_call.1
$region0: #{tpu_custom_call.1}
  #allocation0 [shape = 'u32[]', space=smem, size = 0x4, offset = 0x4, fixed_abs, tag = 'smem constant byte address 0x4 - core index']
  #allocation1 [shape = 'u32[72,128]{1,0:T(1,128)}', space=vmem, size = 0x9000, scoped, tag = 'internal scratch']
  %s0 = inlined_call_operand.vmem [shape: f32[16,32], index: 0, kind: input, shape index: {}]
  %s1 = inlined_call_operand.vmem [shape: f32[32,4], index: 1, kind: input, shape index: {}]
  %s2 = inlined_call_operand.vmem [shape: f32[4,32], index: 2, kind: input, shape index: {}]
  %s3 = inlined_call_operand.vmem [shape: f32[1,32], index: 3, kind: input, shape index: {}]
  %s4 = inlined_call_operand.hbm [shape: f32[16,32], index: 4, kind: output, shape index: {}]
  %s5 = sld [smem:[#allocation0]]
  $region49: #{tpu_custom_call.1} parent=0
    _
  %s7 = ssub.s32 1, %s5
  %s8 = scalar_select 0, %s7, %s5
  $region1: #{tpu_custom_call.1} parent=0
    #allocation2 [shape = 'u8[8192]{0}', space=vmem, size = 0x2000, scoped, tag = 'output window, operand 0']
    #allocation3 [shape = 's32[2]{0}', space=sflag, size = 0x8, scoped, tag = 'scoped memory for tpu_custom_call.1']
    %9 = vsyncpa [#allocation3], 0
    %s10 = scalar_lea.sflag [#allocation3], 1
    %11 = vsyncpa %s10, 0
    loop: start=0, step=1, limit=4
    $region2: #{tpu_custom_call.1} parent=1 // loop_pre_header
      _
    $region3: #{tpu_custom_call.1} parent=1 // loop_header
      %s13 = sphi 0, %s17
      %p14 = scmp.ge.s32.totalorder %s13, 4
      %s23 = sphi 0, %s25
      %s26 = sphi 0, %s23
      %s27 = sphi 0, %s26
      %s43 = sphi 0, %s27
      %s47 = sphi 0, %s47
      %s49 = sphi 0, %s47
      %s50 = sphi 0, %s49
      %s64 = sphi 0, %s50
      %s68 = sphi 0, %s68
      %s70 = sphi 0, %s68
      %s71 = sphi 0, %s70
      %s85 = sphi 0, %s71
      %s89 = sphi 0, %s89
      %s91 = sphi 0, %s89
      %s92 = sphi 0, %s91
      %s106 = sphi 0, %s92
      %s112 = sphi 0, %s114
      %s115 = sphi 0, %s112
      %s116 = sphi 0, %s115
      %s132 = sphi 0, %s116
    $region4: #{tpu_custom_call.1} parent=1 // loop_header_branch
      %16 = sbr.rel (%p14) target = $region8
    $region5: #{tpu_custom_call.1} parent=1 // loop_body
      %s18 = ssub.s32 %s13, 1
      %s19 = ssub.s32 %s13, 2
      %s20 = sadd.s32 %s13, 1
      %s21 = ssub.s32 %s13, %s20
      %p22 = scmp.eq.s32.totalorder %s21, 0
      %s24 = sadd.s32 %s23, 1
      %s25 = scalar_select %p22, %s23, %s24
      %p28 = pneg %p22
      %p29 = scmp.eq.s32.totalorder %s13, 1
      %p30 = por %p28, %p29
      %p31 = scmp.ne.s32.totalorder %s23, %s26
      %p32 = scmp.eq.s32.totalorder %s13, 0
      %p33 = por %p31, %p32
      %p34 = scmp.ne.s32.totalorder %s23, %s26
      %p35 = scmp.eq.s32.totalorder %s18, 1
      %p36 = por %p34, %p35
      %p37 = scmp.ne.s32.totalorder %s26, %s27
      %p38 = scmp.eq.s32.totalorder %s18, 0
      %p39 = por %p37, %p38
      %p40 = scmp.ne.s32.totalorder %s26, %s27
      %p41 = scmp.eq.s32.totalorder %s19, 1
      %p42 = por %p40, %p41
      %p44 = scmp.ne.s32.totalorder %s27, %s43
      %p45 = scmp.eq.s32.totalorder %s19, 0
      %p46 = por %p44, %p45
      %s48 = sadd.s32 %s47, 1
      %p51 = scmp.eq.s32.totalorder %s13, 1
      %p52 = scmp.ne.s32.totalorder %s47, %s49
      %p53 = scmp.eq.s32.totalorder %s13, 0
      %p54 = por %p52, %p53
      %p55 = scmp.ne.s32.totalorder %s47, %s49
      %p56 = scmp.eq.s32.totalorder %s18, 1
      %p57 = por %p55, %p56
      %p58 = scmp.ne.s32.totalorder %s49, %s50
      %p59 = scmp.eq.s32.totalorder %s18, 0
      %p60 = por %p58, %p59
      %p61 = scmp.ne.s32.totalorder %s49, %s50
      %p62 = scmp.eq.s32.totalorder %s19, 1
      %p63 = por %p61, %p62
      %p65 = scmp.ne.s32.totalorder %s50, %s64
      %p66 = scmp.eq.s32.totalorder %s19, 0
      %p67 = por %p65, %p66
      %s69 = sadd.s32 %s68, 1
      %p72 = scmp.eq.s32.totalorder %s13, 1
      %p73 = scmp.ne.s32.totalorder %s68, %s70
      %p74 = scmp.eq.s32.totalorder %s13, 0
      %p75 = por %p73, %p74
      %p76 = scmp.ne.s32.totalorder %s68, %s70
      %p77 = scmp.eq.s32.totalorder %s18, 1
      %p78 = por %p76, %p77
      %p79 = scmp.ne.s32.totalorder %s70, %s71
      %p80 = scmp.eq.s32.totalorder %s18, 0
      %p81 = por %p79, %p80
      %p82 = scmp.ne.s32.totalorder %s70, %s71
      %p83 = scmp.eq.s32.totalorder %s19, 1
      %p84 = por %p82, %p83
      %p86 = scmp.ne.s32.totalorder %s71, %s85
      %p87 = scmp.eq.s32.totalorder %s19, 0
      %p88 = por %p86, %p87
      %s90 = sadd.s32 %s89, 1
      %p93 = scmp.eq.s32.totalorder %s13, 1
      %p94 = scmp.ne.s32.totalorder %s89, %s91
      %p95 = scmp.eq.s32.totalorder %s13, 0
      %p96 = por %p94, %p95
      %p97 = scmp.ne.s32.totalorder %s89, %s91
      %p98 = scmp.eq.s32.totalorder %s18, 1
      %p99 = por %p97, %p98
      %p100 = scmp.ne.s32.totalorder %s91, %s92
      %p101 = scmp.eq.s32.totalorder %s18, 0
      %p102 = por %p100, %p101
      %p103 = scmp.ne.s32.totalorder %s91, %s92
      %p104 = scmp.eq.s32.totalorder %s19, 1
      %p105 = por %p103, %p104
      %p107 = scmp.ne.s32.totalorder %s92, %s106
      %p108 = scmp.eq.s32.totalorder %s19, 0
      %p109 = por %p107, %p108
      %s110 = ssub.s32 %s13, %s20
      %p111 = scmp.eq.s32.totalorder %s110, 0
      %s113 = sadd.s32 %s112, 1
      %s114 = scalar_select %p111, %s112, %s113
      %p117 = pneg %p111
      %p118 = scmp.eq.s32.totalorder %s13, 1
      %p119 = por %p117, %p118
      %p120 = scmp.ne.s32.totalorder %s112, %s115
      %p121 = scmp.eq.s32.totalorder %s13, 0
      %p122 = por %p120, %p121
      %p123 = scmp.ne.s32.totalorder %s112, %s115
      %p124 = scmp.eq.s32.totalorder %s18, 1
      %p125 = por %p123, %p124
      %p126 = scmp.ne.s32.totalorder %s115, %s116
      %p127 = scmp.eq.s32.totalorder %s18, 0
      %p128 = por %p126, %p127
      %p129 = scmp.ne.s32.totalorder %s115, %s116
      %p130 = scmp.eq.s32.totalorder %s19, 1
      %p131 = por %p129, %p130
      %p133 = scmp.ne.s32.totalorder %s116, %s132
      %p134 = scmp.eq.s32.totalorder %s19, 0
      %p135 = por %p133, %p134
      %p136 = scmp.le.s32.totalorder 1, %s13
      %p137 = scmp.lt.s32.totalorder %s13, 3
      %p138 = pnand %p136, %p137
      %p139 = pneg %p138
      // Predicated region
      $region9: #{tpu_custom_call.1} parent=5 // pred_check
        _
      $region10: #{tpu_custom_call.1} parent=5 // pred_check_branch
        %141 = sbr.rel (%p138) target = $region12
      $region11: #{tpu_custom_call.1} parent=5 // pred_region
        %s142 = ssub.s32 %s13, 1
        // Predicated region
        $region13: #{tpu_custom_call.1} parent=11 // pred_check
          %p143 = pneg %p60
        $region14: #{tpu_custom_call.1} parent=11 // pred_check_branch
          %145 = sbr.rel (%p143) target = $region16
        $region15: #{tpu_custom_call.1} parent=11 // pred_region
          _
        $region16: #{tpu_custom_call.1} parent=11 // pred_fallthru
          _
        // Predicated region
        $region17: #{tpu_custom_call.1} parent=11 // pred_check
          %p146 = pneg %p81
        $region18: #{tpu_custom_call.1} parent=11 // pred_check_branch
          %148 = sbr.rel (%p146) target = $region20
        $region19: #{tpu_custom_call.1} parent=11 // pred_region
          _
        $region20: #{tpu_custom_call.1} parent=11 // pred_fallthru
          _
        // Predicated region
        $region21: #{tpu_custom_call.1} parent=11 // pred_check
          %p149 = pneg %p102
        $region22: #{tpu_custom_call.1} parent=11 // pred_check_branch
          %151 = sbr.rel (%p149) target = $region24
        $region23: #{tpu_custom_call.1} parent=11 // pred_region
          _
        $region24: #{tpu_custom_call.1} parent=11 // pred_fallthru
          _
      $region12: #{tpu_custom_call.1} parent=5 // pred_fallthru
        _
      %p152 = scmp.lt.s32.totalorder %s13, 2
      // Predicated region
      $region25: #{tpu_custom_call.1} parent=5 // pred_check
        %p153 = pneg %p152
      $region26: #{tpu_custom_call.1} parent=5 // pred_check_branch
        %155 = sbr.rel (%p153) target = $region28
      $region27: #{tpu_custom_call.1} parent=5 // pred_region
        // Predicated region
        $region29: #{tpu_custom_call.1} parent=27 // pred_check
          %p156 = pneg %p33
        $region30: #{tpu_custom_call.1} parent=27 // pred_check_branch
          %158 = sbr.rel (%p156) target = $region32
        $region31: #{tpu_custom_call.1} parent=27 // pred_region
          %p159 = scmp.lt.s32.totalorder %s13, 1
          %s160 = scalar_select %p159, %s13, 1
          %s161 = smul.addr %s160, 8
          %s162 = scalar_lea.vmem %s0, %s161
        $region32: #{tpu_custom_call.1} parent=27 // pred_fallthru
          _
      $region28: #{tpu_custom_call.1} parent=5 // pred_fallthru
        _
      %p163 = scmp.le.s32.totalorder 1, %s13
      %p164 = scmp.lt.s32.totalorder %s13, 3
      %p165 = pnand %p163, %p164
      %p166 = pneg %p165
      // Predicated region
      $region33: #{tpu_custom_call.1} parent=5 // pred_check
        _
      $region34: #{tpu_custom_call.1} parent=5 // pred_check_branch
        %168 = sbr.rel (%p165) target = $region36
      $region35: #{tpu_custom_call.1} parent=5 // pred_region
        %s169 = ssub.s32 %s13, 1
        %p170 = scmp.lt.s32.totalorder %s18, 1
        %s171 = scalar_select %p170, %s18, 1
        %s172 = smul.addr %s171, 8
        %s173 = scalar_lea.vmem %s0, %s172
        %p174 = pneg %p39
        %p175 = pneg %p36
        %p176 = pneg %p60
        %p177 = pneg %p57
        %p178 = pneg %p81
        %p179 = pneg %p78
        %p180 = pneg %p102
        %p181 = pneg %p99
        %p182 = pneg %p128
        %p183 = pneg %p125
        %s184 = sand.u32 %s115, 1
        %s185 = scalar_lea.sflag [#allocation3], %s184
        %s186 = sand.u32 %s115, 1
        %s187 = smul.addr %s186, 8
        %s188 = scalar_lea.vmem [#allocation2], %s187
        %p189 = scmp.lt.s32.totalorder %s18, 1
        %s190 = scalar_select %p189, %s18, 1
        %s191 = smul.addr %s190, 8
        %s192 = scalar_lea.vmem %s0, %s191
        %v193 = vld [vmem:[%s192] sm:$0xff]
        %v194 = vld [vmem:[%s1] sm:$0xff]
        %v195 = vld [vmem:[%s1 + $0x8] sm:$0xff]
        %v196 = vld [vmem:[%s1 + $0x10] sm:$0xff]
        %v197 = vld [vmem:[%s1 + $0x18] sm:$0xff]
        %v198 = vld [vmem:[%s2] sm:$0xf]
        %v199 = vld [vmem:[%s3] sm:$0x1]
        %vm200 = vcmask 261120
        %v202 = vsel %vm200, %v193, 0
        %204 = vmatpush.msra.mxu0 0.0
        %205 = vmatpush.msra.mxu0 0.0
        %206 = vmatpush.msra.mxu0 0.0
        %207 = vmatpush.msra.mxu0 0.0
        %208 = vmatpush.msra.mxu0 0.0
        %209 = vmatpush.msra.mxu0 0.0
        %210 = vmatpush.msra.mxu0 0.0
        %211 = vmatpush.msra.mxu0 0.0
        %212 = vmatpush.msra.mxu0 0.0
        %213 = vmatpush.msra.mxu0 0.0
        %214 = vmatpush.msra.mxu0 0.0
        %215 = vmatpush.msra.mxu0 0.0
        %216 = vmatpush.msra.mxu0 %v197
        %217 = vmatpush.msra.mxu0 %v196
        %218 = vmatpush.msra.mxu0 %v195
        %219 = vmatpush.msra.mxu0 %v194
        %220 = vmatmul.f32.gmra.mxu0 %v202
        %v221 = vpop.f32.mrf.mxu0
        %v222 = vadd.f32 0.0, %v221
        %223 = vdwg.mxu0
        %v224 = vmul.f32 %v193, %v193
        %v226 = vsel %vm200, %v224, 0
        %228 = vmatpush.msra.mxu0 0.0
        %229 = vmatpush.msra.mxu0 0.0
        %230 = vmatpush.msra.mxu0 0.0
        %231 = vmatpush.msra.mxu0 0.0
        %232 = vmatpush.msra.mxu0 0.0
        %233 = vmatpush.msra.mxu0 0.0
        %234 = vmatpush.msra.mxu0 0.0
        %235 = vmatpush.msra.mxu0 0.0
        %236 = vmatpush.msra.mxu0 0.0
        %237 = vmatpush.msra.mxu0 0.0
        %238 = vmatpush.msra.mxu0 0.0
        %239 = vmatpush.msra.mxu0 0.0
        %240 = vmatpush.msra.mxu0 %v197
        %241 = vmatpush.msra.mxu0 %v196
        %242 = vmatpush.msra.mxu0 %v195
        %243 = vmatpush.msra.mxu0 %v194
        %244 = vmatmul.f32.gmra.mxu0 %v226
        %v245 = vpop.f32.mrf.mxu0
        %v246 = vadd.f32 0.0, %v245
        %247 = vdwg.mxu0
        %v248 = vmul.f32 %v222, 0.125
        %v249 = vmul.f32 %v246, 0.125
        %v250 = vmul.f32 %v248, %v248
        %v251 = vsub.f32 %v249, %v250
        %v252 = vmax.f32 %v251, 0.0
        %v253 = vadd.f32 %v252, 1e-05
        %v254 = vrsqrt.pop %v253
        %v255 = vmul.f32 %v254, %v253
        %v256 = vmul.f32 %v255, %v254
        %v257 = vmul.f32 0.5, %v256
        %v258 = vsub.f32 1.5, %v257
        %v259 = vmul.f32 %v254, %v258
        %vm260 = vweird.f32 %v253
        %vm261 = vweird.f32 %v254
        %vm262 = vmor %vm260, %vm261
        %v263 = vsel %vm262, %v254, %v259
        %vm264 = vcmask 31744
        %v266 = vsel %vm264, %v263, 0
        %vm268 = vcmask 1043456
        %v270 = vsel %vm268, %v198, 0
        %272 = vmatpush.msra.mxu0 0.0
        %273 = vmatpush.msra.mxu0 0.0
        %274 = vmatpush.msra.mxu0 0.0
        %275 = vmatpush.msra.mxu0 0.0
        %276 = vmatpush.msra.mxu0 0.0
        %277 = vmatpush.msra.mxu0 0.0
        %278 = vmatpush.msra.mxu0 0.0
        %279 = vmatpush.msra.mxu0 0.0
        %280 = vmatpush.msra.mxu0 0.0
        %281 = vmatpush.msra.mxu0 0.0
        %282 = vmatpush.msra.mxu0 0.0
        %283 = vmatpush.msra.mxu0 0.0
        %284 = vmatpush.msra.mxu0 0.0
        %285 = vmatpush.msra.mxu0 0.0
        %286 = vmatpush.msra.mxu0 0.0
        %287 = vmatpush.msra.mxu0 %v270
        %288 = vmatmul.f32.gmra.mxu0 %v266
        %v289 = vpop.f32.mrf.mxu0
        %v290 = vadd.f32 0.0, %v289
        %291 = vdwg.mxu0
        %v292 = vmul.f32 %v248, %v263
        %v294 = vsel %vm264, %v292, 0
        %296 = vmatpush.msra.mxu0 0.0
        %297 = vmatpush.msra.mxu0 0.0
        %298 = vmatpush.msra.mxu0 0.0
        %299 = vmatpush.msra.mxu0 0.0
        %300 = vmatpush.msra.mxu0 0.0
        %301 = vmatpush.msra.mxu0 0.0
        %302 = vmatpush.msra.mxu0 0.0
        %303 = vmatpush.msra.mxu0 0.0
        %304 = vmatpush.msra.mxu0 0.0
        %305 = vmatpush.msra.mxu0 0.0
        %306 = vmatpush.msra.mxu0 0.0
        %307 = vmatpush.msra.mxu0 0.0
        %308 = vmatpush.msra.mxu0 0.0
        %309 = vmatpush.msra.mxu0 0.0
        %310 = vmatpush.msra.mxu0 0.0
        %311 = vmatpush.msra.mxu0 %v270
        %312 = vmatmul.f32.gmra.mxu0 %v294
        %v313 = vpop.f32.mrf.mxu0
        %v314 = vadd.f32 0.0, %v313
        %315 = vdwg.mxu0
        %v317 = vperm.slane %v199, 0
        %v319 = vsub.f32 %v317, %v314
        %v320 = vmul.f32 %v193, %v290
        %v321 = vadd.f32 %v320, %v319
        %322 = vst.msk [vmem:[%s188] sm:$0xff] %vm200, %v321
        %s323 = sand.u32 %s115, 1
        %s324 = scalar_lea.sflag [#allocation3], %s323
        %s325 = sand.u32 %s115, 1
        %s326 = smul.addr %s325, 8
        %s327 = scalar_lea.vmem [#allocation2], %s326
        // Predicated region
        $region37: #{tpu_custom_call.1} parent=35 // pred_check
          %p328 = pneg %p125
        $region38: #{tpu_custom_call.1} parent=35 // pred_check_branch
          %330 = sbr.rel (%p328) target = $region40
        $region39: #{tpu_custom_call.1} parent=35 // pred_region
          %332 = vsyncadd %s324, 0
          %s333 = smul.addr %s18, 8
          %s334 = scalar_lea.hbm %s4, %s333
          %s336 = sshll.u32 %s327, 4
          %s337 = int_to_ptr.vmem [resolvable:$true] %s336
          %s338 = sshll.u32 %s334, 4
          %s339 = int_to_ptr.hbm [resolvable:$true] %s338
          %341 = dma.vmem_to_hbm [thread:$0]  %s337, 128, %s339, %s324
        $region40: #{tpu_custom_call.1} parent=35 // pred_fallthru
          _
      $region36: #{tpu_custom_call.1} parent=5 // pred_fallthru
        _
      %p342 = scmp.le.s32.totalorder 2, %s13
      // Predicated region
      $region41: #{tpu_custom_call.1} parent=5 // pred_check
        %p343 = pneg %p342
      $region42: #{tpu_custom_call.1} parent=5 // pred_check_branch
        %345 = sbr.rel (%p343) target = $region44
      $region43: #{tpu_custom_call.1} parent=5 // pred_region
        %s346 = ssub.s32 %s13, 2
        // Predicated region
        $region45: #{tpu_custom_call.1} parent=43 // pred_check
          %p347 = pneg %p131
        $region46: #{tpu_custom_call.1} parent=43 // pred_check_branch
          %349 = sbr.rel (%p347) target = $region48
        $region47: #{tpu_custom_call.1} parent=43 // pred_region
          %s350 = sand.u32 %s116, 1
          %s351 = scalar_lea.sflag [#allocation3], %s350
          %s352 = sand.u32 %s116, 1
          %s353 = smul.addr %s352, 8
          %s354 = scalar_lea.vmem [#allocation2], %s353
          %356 = dma.done %s351, 128
        $region48: #{tpu_custom_call.1} parent=43 // pred_fallthru
          _
      $region44: #{tpu_custom_call.1} parent=5 // pred_fallthru
        _
    $region6: #{tpu_custom_call.1} parent=1 // loop_footer
      %s17 = sadd.s32 1, %s13
    $region7: #{tpu_custom_call.1} parent=1 // loop_footer_branch
      %12 = sbr.rel target = $region3
    $region8: #{tpu_custom_call.1} parent=1 // loop_exit
      _
    %357 = vsyncpa [#allocation3], 1
    %s358 = scalar_lea.sflag [#allocation3], 1
    %359 = vsyncpa %s358, 1

</llo_original>
